<compile_context>
chip_gen: v7x
topology: tpu7x:2x2x1
jax: 0.10.0
libtpu: 0.0.40
codegen_flags: <defaults>
</compile_context>

<pallas_src>
import functools

import jax
import jax.numpy as jnp
from jax.experimental import pallas as pl
from jax.experimental.pallas import tpu as pltpu

LANES = 128
SUBLANES = 8
MAX_BLOCK_ROWS = 1024      # 1024 x 128 x 4B = 512 KiB per f32 block
NUM_CORE_SPLITS = 2        # v7x has 2 TensorCores; harmless serial loop elsewhere


def _round_up(a, b):
    return (a + b - 1) // b * b


def _gan_loss_kernel(x_ref, out_ref, *, mode, sign, target, n,
                     block_rows, tiles_per_split, has_pad):
    """Per-tile elementwise loss + lane-dense partial-sum accumulation.

    mode: 'bce'        -> BCEWithLogits(x, target)          ('vanilla')
          'mse'        -> (x - target)^2                     ('lsgan')
          'sum'        -> x          (sign applied outside)  ('wgan', hinge-gen)
          'hinge_disc' -> relu(1 + sign * x)                 ('hinge', is_disc)
    """
    c = pl.program_id(0)        # core split (parallel)
    i = pl.program_id(1)        # row-tile within the split (arbitrary / reduce)

    @pl.when(i == 0)
    def _():
        out_ref[...] = jnp.zeros_like(out_ref)

    x = x_ref[...].astype(jnp.float32)

    if mode == "bce":
        # Numerically-stable BCEWithLogits with constant target:
        #   max(x, 0) - x * t + log(1 + exp(-|x|))
        per = (jnp.maximum(x, 0.0) - x * target
               + jnp.log(1.0 + jnp.exp(-jnp.abs(x))))
    elif mode == "mse":
        d = x - target
        per = d * d
    elif mode == "sum":
        per = x
    elif mode == "hinge_disc":
        per = jnp.maximum(1.0 + sign * x, 0.0)
    else:
        raise ValueError(f"unknown mode {mode}")

    if has_pad:
        # Mask out padded tail elements (absolute flat index >= n).  `n`,
        # `block_rows`, `tiles_per_split` are compile-time constants; the
        # mask is a couple of VPU ops per vreg and this kernel is mem-bound.
        row0 = (c * tiles_per_split + i) * block_rows
        flat_idx = ((row0
                     + jax.lax.broadcasted_iota(jnp.int32,
                                                (block_rows, LANES), 0))
                    * LANES
                    + jax.lax.broadcasted_iota(jnp.int32,
                                               (block_rows, LANES), 1))
        per = jnp.where(flat_idx < n, per, 0.0)

    # Pure VPU vreg adds down to one (8, 128) vreg; the cross-lane reduce
    # happens exactly once, outside the kernel.
    partial = per.reshape(block_rows // SUBLANES, SUBLANES, LANES).sum(axis=0)
    out_ref[...] += partial.reshape(1, SUBLANES, LANES)


def _gan_reduce_mean(x, mode, sign, target, post_sign=1.0):
    """Flatten -> lane-dense (rows, 128) slab -> pallas partial sums -> mean."""
    flat = x.reshape(-1)
    n = flat.shape[0]
    if flat.dtype == jnp.float64:
        flat = flat.astype(jnp.float32)

    itemsize = jnp.dtype(flat.dtype).itemsize
    # Minimum sublane tile: 8 rows f32, 16 rows bf16/f16, 32 rows int8/fp8.
    min_rows = SUBLANES * max(1, 4 // itemsize)

    rows_needed = _round_up(n, LANES) // LANES
    block_rows = min(
        MAX_BLOCK_ROWS,
        _round_up(_round_up(rows_needed, NUM_CORE_SPLITS) // NUM_CORE_SPLITS,
                  min_rows))
    tiles_per_split = (_round_up(rows_needed, NUM_CORE_SPLITS * block_rows)
                       // (NUM_CORE_SPLITS * block_rows))
    rows = NUM_CORE_SPLITS * tiles_per_split * block_rows

    pad = rows * LANES - n
    if pad:
        # Tail-only pad; pad values are irrelevant (masked in-kernel).
        flat = jnp.pad(flat, (0, pad))
    xp = flat.reshape(rows, LANES)

    kernel = functools.partial(
        _gan_loss_kernel, mode=mode, sign=float(sign), target=float(target),
        n=n, block_rows=block_rows, tiles_per_split=tiles_per_split,
        has_pad=bool(pad))

    partials = pl.pallas_call(
        kernel,
        out_shape=jax.ShapeDtypeStruct((NUM_CORE_SPLITS, SUBLANES, LANES),
                                       jnp.float32),
        grid_spec=pltpu.PrefetchScalarGridSpec(
            num_scalar_prefetch=0,
            grid=(NUM_CORE_SPLITS, tiles_per_split),
            in_specs=[
                pl.BlockSpec((block_rows, LANES),
                             lambda c, i: (c * tiles_per_split + i, 0)),
            ],
            out_specs=pl.BlockSpec((1, SUBLANES, LANES),
                                   lambda c, i: (c, 0, 0)),
        ),
        compiler_params=pltpu.CompilerParams(
            dimension_semantics=("parallel", "arbitrary")),
    )(xp)

    total = jnp.sum(partials)          # single tiny final reduce
    return jnp.float32(post_sign) * total / jnp.float32(n)


class GANLossPallas:
    """JAX/Pallas port of GANLoss.forward."""

    def __init__(self, gan_type, real_label_val=1.0, fake_label_val=0.0,
                 loss_weight=1.0):
        if gan_type not in ("vanilla", "lsgan", "wgan", "hinge"):
            raise NotImplementedError(f"GAN type {gan_type} is not implemented.")
        self.gan_type = gan_type
        self.real_label_val = float(real_label_val)
        self.fake_label_val = float(fake_label_val)
        self.loss_weight = float(loss_weight)

    def __call__(self, x, target_is_real, is_disc=False):
        target_is_real = bool(target_is_real)
        if self.gan_type == "hinge":
            if is_disc:
                sign = -1.0 if target_is_real else 1.0
                loss = _gan_reduce_mean(x, "hinge_disc", sign, 0.0)
            else:
                loss = _gan_reduce_mean(x, "sum", 0.0, 0.0, post_sign=-1.0)
        elif self.gan_type == "wgan":
            post_sign = -1.0 if target_is_real else 1.0
            loss = _gan_reduce_mean(x, "sum", 0.0, 0.0, post_sign=post_sign)
        else:
            target_val = (self.real_label_val if target_is_real
                          else self.fake_label_val)
            mode = "bce" if self.gan_type == "vanilla" else "mse"
            loss = _gan_reduce_mean(x, mode, 0.0, target_val)
        return loss if is_disc else loss * jnp.float32(self.loss_weight)


# ----- pure-JAX reference for verification ---------------------------------
def _reference(gan_type, x, target_is_real, is_disc,
               real_val=1.0, fake_val=0.0, loss_weight=1.0):
    x = x.astype(jnp.float32)
    if gan_type == "hinge":
        if is_disc:
            xi = -x if target_is_real else x
            loss = jnp.mean(jax.nn.relu(1.0 + xi))
        else:
            loss = -jnp.mean(x)
    elif gan_type == "wgan":
        loss = -jnp.mean(x) if target_is_real else jnp.mean(x)
    else:
        t = jnp.full_like(x, real_val if target_is_real else fake_val)
        if gan_type == "vanilla":
            per = (jnp.maximum(x, 0.0) - x * t
                   + jnp.log(1.0 + jnp.exp(-jnp.abs(x))))
            loss = jnp.mean(per)
        else:
            loss = jnp.mean((x - t) ** 2)
    return loss if is_disc else loss * loss_weight


if __name__ == "__main__":
    key = jax.random.PRNGKey(0)
    # discriminator prediction map, NCHW
    x = jax.random.normal(key, (2, 4, 16, 16), dtype=jnp.float32)

    cases = []
    for gan_type in ("vanilla", "lsgan", "wgan", "hinge"):
        for target_is_real in (True, False):
            for is_disc in (False, True):
                cases.append((gan_type, target_is_real, is_disc))

    for gan_type, target_is_real, is_disc in cases:
        mod = GANLossPallas(gan_type, loss_weight=0.5)
        out = mod(x, target_is_real, is_disc=is_disc)
        out = jax.block_until_ready(out)
        ref = _reference(gan_type, x, target_is_real, is_disc, loss_weight=0.5)
        assert jnp.allclose(out, ref, atol=1e-5, rtol=1e-5), (
            gan_type, target_is_real, is_disc, float(out), float(ref))

    print("KERNEL_OK")
</pallas_src>

<mosaic_0001>
module attributes {stable_mosaic.version = 11 : i64} {
  func.func @_gan_loss_kernel(%arg0: i32, %arg1: i32, %arg2: memref<8x128xf32, #tpu.memory_space<vmem>>, %arg3: memref<1x8x128xf32, #tpu.memory_space<vmem>>) attributes {dimension_semantics = [#tpu.dimension_semantics<parallel>, #tpu.dimension_semantics<arbitrary>], iteration_bounds = array<i64: 2, 1>, scalar_prefetch = 0 : i64, scratch_operands = 0 : i64, tpu.core_type = #tpu.core_type<tc>, window_params = [{transform_indices = @transform_0, window_bounds = array<i64: 8, 128>}, {transform_indices = @transform_1, window_bounds = array<i64: 1, 8, 128>}]} {
    %c0_i32 = arith.constant 0 : i32
    %0 = arith.cmpi eq, %arg1, %c0_i32 : i32
    %1 = arith.extui %0 : i1 to i32
    %c0_i32_0 = arith.constant 0 : i32
    %2 = arith.cmpi ne, %1, %c0_i32_0 : i32
    scf.if %2 {
      %cst_12 = arith.constant 0.000000e+00 : f32
      %23 = vector.broadcast %cst_12 : f32 to vector<1x8x128xf32>
      %c0_13 = arith.constant 0 : index
      %c0_14 = arith.constant 0 : index
      %c0_15 = arith.constant 0 : index
      %24 = vector.load %arg3[%c0_13, %c0_14, %c0_15] : memref<1x8x128xf32, #tpu.memory_space<vmem>>, vector<1x8x128xf32>
      tpu.vector_store %arg3[%c0_13, %c0_14, %c0_15], %23 {strides = array<i32>} : memref<1x8x128xf32, #tpu.memory_space<vmem>>, vector<1x8x128xf32>,
    } else {
    }
    %c0 = arith.constant 0 : index
    %c0_1 = arith.constant 0 : index
    %3 = vector.load %arg2[%c0, %c0_1] : memref<8x128xf32, #tpu.memory_space<vmem>>, vector<8x128xf32>
    %cst = arith.constant 0.000000e+00 : f32
    %4 = vector.broadcast %cst : f32 to vector<8x128xf32>
    %5 = arith.maximumf %3, %4 : vector<8x128xf32>
    %cst_2 = arith.constant 1.000000e+00 : f32
    %6 = vector.broadcast %cst_2 : f32 to vector<8x128xf32>
    %7 = arith.mulf %3, %6 : vector<8x128xf32>
    %8 = arith.subf %5, %7 : vector<8x128xf32>
    %9 = math.absf %3 : vector<8x128xf32>
    %cst_3 = arith.constant 0.000000e+00 : f32
    %10 = vector.broadcast %cst_3 : f32 to vector<8x128xf32>
    %11 = arith.subf %10, %9 : vector<8x128xf32>
    %12 = math.exp %11 : vector<8x128xf32>
    %cst_4 = arith.constant 1.000000e+00 : f32
    %13 = vector.broadcast %cst_4 : f32 to vector<8x128xf32>
    %14 = arith.addf %13, %12 : vector<8x128xf32>
    %15 = math.log %14 : vector<8x128xf32>
    %16 = arith.addf %8, %15 : vector<8x128xf32>
    %17 = vector.shape_cast %16 : vector<8x128xf32> to vector<1x8x128xf32>
    %cst_5 = arith.constant dense<0.000000e+00> : vector<8x128xf32>
    %18 = vector.multi_reduction <add>, %17, %cst_5 [0] : vector<1x8x128xf32> to vector<8x128xf32>
    %c0_6 = arith.constant 0 : index
    %c0_7 = arith.constant 0 : index
    %c0_8 = arith.constant 0 : index
    %19 = vector.load %arg3[%c0_6, %c0_7, %c0_8] : memref<1x8x128xf32, #tpu.memory_space<vmem>>, vector<1x8x128xf32>
    %20 = vector.shape_cast %18 : vector<8x128xf32> to vector<1x8x128xf32>
    %21 = arith.addf %19, %20 : vector<1x8x128xf32>
    %c0_9 = arith.constant 0 : index
    %c0_10 = arith.constant 0 : index
    %c0_11 = arith.constant 0 : index
    %22 = vector.load %arg3[%c0_9, %c0_10, %c0_11] : memref<1x8x128xf32, #tpu.memory_space<vmem>>, vector<1x8x128xf32>
    tpu.vector_store %arg3[%c0_9, %c0_10, %c0_11], %21 {strides = array<i32>} : memref<1x8x128xf32, #tpu.memory_space<vmem>>, vector<1x8x128xf32>,
    return
  }
  func.func @transform_0(%arg0: i32, %arg1: i32) -> (i32, i32) {
    %c1_i32 = arith.constant 1 : i32
    %0 = arith.muli %arg0, %c1_i32 : i32
    %1 = arith.addi %0, %arg1 : i32
    %c0_i32 = arith.constant 0 : i32
    %c0_i32_0 = arith.constant 0 : i32
    return %1, %c0_i32 : i32, i32
  }
  func.func @transform_1(%arg0: i32, %arg1: i32) -> (i32, i32, i32) {
    %c0_i32 = arith.constant 0 : i32
    %c0_i32_0 = arith.constant 0 : i32
    %c0_i32_1 = arith.constant 0 : i32
    return %arg0, %c0_i32, %c0_i32_0 : i32, i32, i32
  }
}

</mosaic_0001>

<llo_original>
// kernel: tpu_custom_call.1
$region0: #{tpu_custom_call.1}
  #allocation0 [shape = 'u32[]', space=smem, size = 0x4, offset = 0x4, fixed_abs, tag = 'smem constant byte address 0x4 - core index']
  #allocation1 [shape = 'u32[144,128]{1,0:T(1,128)}', space=vmem, size = 0x12000, scoped, tag = 'internal scratch']
  %s0 = inlined_call_operand.hbm [shape: f32[16,128], index: 0, kind: input, shape index: {}]
  %s1 = inlined_call_operand.hbm [shape: f32[2,8,128], index: 1, kind: output, shape index: {}]
  %s2 = sld [smem:[#allocation0]]
  $region45: #{tpu_custom_call.1} parent=0
    _
  %s4 = ssub.s32 1, %s2
  %s5 = scalar_select 0, %s4, %s2
  $region1: #{tpu_custom_call.1} parent=0
    #allocation2 [shape = 'u8[8192]{0}', space=vmem, size = 0x2000, scoped, tag = 'input window, operand 0']
    #allocation3 [shape = 's32[2]{0}', space=sflag, size = 0x8, scoped, tag = 'scoped memory for tpu_custom_call.1']
    #allocation4 [shape = 's32[2]{0}', space=sflag, size = 0x8, scoped, tag = 'scoped memory for tpu_custom_call.1']
    #allocation5 [shape = 'u8[8192]{0}', space=vmem, size = 0x2000, scoped, tag = 'output window, operand 0']
    %6 = vsyncpa [#allocation3], 0
    %s7 = scalar_lea.sflag [#allocation3], 1
    %8 = vsyncpa %s7, 0
    %9 = vsyncpa [#allocation4], 0
    %s10 = scalar_lea.sflag [#allocation4], 1
    %11 = vsyncpa %s10, 0
    loop: start=0, step=1, limit=4
    $region2: #{tpu_custom_call.1} parent=1 // loop_pre_header
      _
    $region3: #{tpu_custom_call.1} parent=1 // loop_header
      %s13 = sphi 0, %s17
      %p14 = scmp.ge.s32.totalorder %s13, 4
      %s20 = sphi 0, %s32
      %s21 = sphi 0, %s28
      %s22 = sphi 0, %s20
      %s23 = sphi 0, %s21
      %s24 = sphi 0, %s22
      %s25 = sphi 0, %s23
      %s37 = sphi 0, %s39
      %s40 = sphi 0, %s37
      %s41 = sphi 0, %s40
      %s57 = sphi 0, %s41
      %s63 = sphi 0, %s65
      %s66 = sphi 0, %s63
      %s67 = sphi 0, %s66
      %s83 = sphi 0, %s67
    $region4: #{tpu_custom_call.1} parent=1 // loop_header_branch
      %16 = sbr.rel (%p14) target = $region8
    $region5: #{tpu_custom_call.1} parent=1 // loop_body
      %s18 = ssub.s32 %s13, 1
      %s19 = ssub.s32 %s13, 2
      %s26 = sadd.s32 1, %s21
      %p27 = scmp.ge.s32.totalorder %s26, 1
      %s28 = scalar_select %p27, 0, %s26
      %s29 = sadd.s32 1, %s20
      %s30 = scalar_select %p27, %s29, %s20
      %p31 = scmp.ge.s32.totalorder %s30, 2
      %s32 = scalar_select %p31, 0, %s30
      %s33 = sadd.s32 %s20, %s21
      %s34 = sadd.s32 %s32, %s28
      %s35 = ssub.s32 %s33, %s34
      %p36 = scmp.eq.s32.totalorder %s35, 0
      %s38 = sadd.s32 %s37, 1
      %s39 = scalar_select %p36, %s37, %s38
      %p42 = pneg %p36
      %p43 = scmp.eq.s32.totalorder %s13, 1
      %p44 = por %p42, %p43
      %p45 = scmp.ne.s32.totalorder %s37, %s40
      %p46 = scmp.eq.s32.totalorder %s13, 0
      %p47 = por %p45, %p46
      %p48 = scmp.ne.s32.totalorder %s37, %s40
      %p49 = scmp.eq.s32.totalorder %s18, 1
      %p50 = por %p48, %p49
      %p51 = scmp.ne.s32.totalorder %s40, %s41
      %p52 = scmp.eq.s32.totalorder %s18, 0
      %p53 = por %p51, %p52
      %p54 = scmp.ne.s32.totalorder %s40, %s41
      %p55 = scmp.eq.s32.totalorder %s19, 1
      %p56 = por %p54, %p55
      %p58 = scmp.ne.s32.totalorder %s41, %s57
      %p59 = scmp.eq.s32.totalorder %s19, 0
      %p60 = por %p58, %p59
      %s61 = ssub.s32 %s20, %s32
      %p62 = scmp.eq.s32.totalorder %s61, 0
      %s64 = sadd.s32 %s63, 1
      %s65 = scalar_select %p62, %s63, %s64
      %p68 = pneg %p62
      %p69 = scmp.eq.s32.totalorder %s13, 1
      %p70 = por %p68, %p69
      %p71 = scmp.ne.s32.totalorder %s63, %s66
      %p72 = scmp.eq.s32.totalorder %s13, 0
      %p73 = por %p71, %p72
      %p74 = scmp.ne.s32.totalorder %s63, %s66
      %p75 = scmp.eq.s32.totalorder %s18, 1
      %p76 = por %p74, %p75
      %p77 = scmp.ne.s32.totalorder %s66, %s67
      %p78 = scmp.eq.s32.totalorder %s18, 0
      %p79 = por %p77, %p78
      %p80 = scmp.ne.s32.totalorder %s66, %s67
      %p81 = scmp.eq.s32.totalorder %s19, 1
      %p82 = por %p80, %p81
      %p84 = scmp.ne.s32.totalorder %s67, %s83
      %p85 = scmp.eq.s32.totalorder %s19, 0
      %p86 = por %p84, %p85
      %p87 = scmp.le.s32.totalorder 1, %s13
      %p88 = scmp.lt.s32.totalorder %s13, 3
      %p89 = pnand %p87, %p88
      %p90 = pneg %p89
      // Predicated region
      $region9: #{tpu_custom_call.1} parent=5 // pred_check
        _
      $region10: #{tpu_custom_call.1} parent=5 // pred_check_branch
        %92 = sbr.rel (%p89) target = $region12
      $region11: #{tpu_custom_call.1} parent=5 // pred_region
        %s93 = ssub.s32 %s13, 1
      $region12: #{tpu_custom_call.1} parent=5 // pred_fallthru
        _
      %p94 = scmp.lt.s32.totalorder %s13, 2
      // Predicated region
      $region13: #{tpu_custom_call.1} parent=5 // pred_check
        %p95 = pneg %p94
      $region14: #{tpu_custom_call.1} parent=5 // pred_check_branch
        %97 = sbr.rel (%p95) target = $region16
      $region15: #{tpu_custom_call.1} parent=5 // pred_region
        // Predicated region
        $region17: #{tpu_custom_call.1} parent=15 // pred_check
          %p98 = pneg %p47
        $region18: #{tpu_custom_call.1} parent=15 // pred_check_branch
          %100 = sbr.rel (%p98) target = $region20
        $region19: #{tpu_custom_call.1} parent=15 // pred_region
          %s101 = sand.u32 %s37, 1
          %s102 = scalar_lea.sflag [#allocation3], %s101
          %s103 = sand.u32 %s37, 1
          %s104 = smul.addr %s103, 8
          %s105 = scalar_lea.vmem [#allocation2], %s104
          %s106 = sadd.s32 %s20, %s21
          %s108 = ssub.s32 128, 128
          %109 = vsyncadd %s102, %s108
          %s110 = smul.addr %s106, 128
          %s111 = scalar_lea.hbm %s0, %s110
          %s113 = sshll.u32 %s105, 4
          %s114 = int_to_ptr.vmem [resolvable:$true] %s113
          %116 = dma.hbm_to_vmem [thread:$0]  %s111, 128, %s114, %s102
        $region20: #{tpu_custom_call.1} parent=15 // pred_fallthru
          _
      $region16: #{tpu_custom_call.1} parent=5 // pred_fallthru
        _
      %p117 = scmp.le.s32.totalorder 1, %s13
      %p118 = scmp.lt.s32.totalorder %s13, 3
      %p119 = pnand %p117, %p118
      %p120 = pneg %p119
      // Predicated region
      $region21: #{tpu_custom_call.1} parent=5 // pred_check
        _
      $region22: #{tpu_custom_call.1} parent=5 // pred_check_branch
        %122 = sbr.rel (%p119) target = $region24
      $region23: #{tpu_custom_call.1} parent=5 // pred_region
        %s123 = ssub.s32 %s13, 1
        %s124 = sand.u32 %s40, 1
        %s125 = scalar_lea.sflag [#allocation3], %s124
        %s126 = sand.u32 %s40, 1
        %s127 = smul.addr %s126, 8
        %s128 = scalar_lea.vmem [#allocation2], %s127
        // Predicated region
        $region25: #{tpu_custom_call.1} parent=23 // pred_check
          %p129 = pneg %p53
        $region26: #{tpu_custom_call.1} parent=23 // pred_check_branch
          %131 = sbr.rel (%p129) target = $region28
        $region27: #{tpu_custom_call.1} parent=23 // pred_region
          %132 = dma.done %s125, 128
        $region28: #{tpu_custom_call.1} parent=23 // pred_fallthru
          _
        %s133 = sand.u32 %s40, 1
        %s134 = scalar_lea.sflag [#allocation3], %s133
        %s135 = sand.u32 %s40, 1
        %s136 = smul.addr %s135, 8
        %s137 = scalar_lea.vmem [#allocation2], %s136
        %p138 = pneg %p53
        %p139 = pneg %p50
        %p140 = pneg %p79
        %p141 = pneg %p76
        %s142 = sand.u32 %s66, 1
        %s143 = scalar_lea.sflag [#allocation4], %s142
        %s144 = sand.u32 %s66, 1
        %s145 = smul.addr %s144, 8
        %s146 = scalar_lea.vmem [#allocation5], %s145
        %s147 = sadd.s32 %s22, %s23
        %p148 = scmp.eq.s32.totalorder %s23, 0
        // Predicated region
        $region29: #{tpu_custom_call.1} parent=23 // pred_check
          %p149 = pneg %p148
        $region30: #{tpu_custom_call.1} parent=23 // pred_check_branch
          %151 = sbr.rel (%p149) target = $region32
        $region31: #{tpu_custom_call.1} parent=23 // pred_region
          %152 = vst [vmem:[%s146] sm:$0xff] 0.0
        $region32: #{tpu_custom_call.1} parent=23 // pred_fallthru
          _
        %v153 = vld [vmem:[%s128] sm:$0xff]
        %v154 = vmax.f32 %v153, 0.0
        %v155 = vsub.f32 %v154, %v153
        %v156 = vand.u32 2147483647, %v153
        %v157 = vsub.f32 0.0, %v156
        %v158 = vmul.f32 %v157, 1.442695
        %v159 = vpow.pop %v158
        %v160 = vadd.f32 %v159, 1.0
        %v161 = vlog2.pop %v160
        %v162 = vmul.f32 %v161, 0.6931472
        %v163 = vadd.f32 %v155, %v162
        %v164 = vadd.f32 %v163, 0.0
        %v165 = vld [vmem:[%s146] sm:$0xff]
        %v166 = vadd.f32 %v165, %v164
        %167 = vst [vmem:[%s146] sm:$0xff] %v166
        %s168 = sand.u32 %s66, 1
        %s169 = scalar_lea.sflag [#allocation4], %s168
        %s170 = sand.u32 %s66, 1
        %s171 = smul.addr %s170, 8
        %s172 = scalar_lea.vmem [#allocation5], %s171
        // Predicated region
        $region33: #{tpu_custom_call.1} parent=23 // pred_check
          %p173 = pneg %p76
        $region34: #{tpu_custom_call.1} parent=23 // pred_check_branch
          %175 = sbr.rel (%p173) target = $region36
        $region35: #{tpu_custom_call.1} parent=23 // pred_region
          %s177 = ssub.s32 128, 128
          %178 = vsyncadd %s169, %s177
          %s179 = smul.addr %s22, 128
          %s180 = scalar_lea.hbm %s1, %s179
          %s182 = sshll.u32 %s172, 4
          %s183 = int_to_ptr.vmem [resolvable:$true] %s182
          %185 = dma.vmem_to_hbm [thread:$0]  %s183, 128, %s180, %s169
        $region36: #{tpu_custom_call.1} parent=23 // pred_fallthru
          _
      $region24: #{tpu_custom_call.1} parent=5 // pred_fallthru
        _
      %p186 = scmp.le.s32.totalorder 2, %s13
      // Predicated region
      $region37: #{tpu_custom_call.1} parent=5 // pred_check
        %p187 = pneg %p186
      $region38: #{tpu_custom_call.1} parent=5 // pred_check_branch
        %189 = sbr.rel (%p187) target = $region40
      $region39: #{tpu_custom_call.1} parent=5 // pred_region
        %s190 = ssub.s32 %s13, 2
        // Predicated region
        $region41: #{tpu_custom_call.1} parent=39 // pred_check
          %p191 = pneg %p82
        $region42: #{tpu_custom_call.1} parent=39 // pred_check_branch
          %193 = sbr.rel (%p191) target = $region44
        $region43: #{tpu_custom_call.1} parent=39 // pred_region
          %s194 = sand.u32 %s67, 1
          %s195 = scalar_lea.sflag [#allocation4], %s194
          %s196 = sand.u32 %s67, 1
          %s197 = smul.addr %s196, 8
          %s198 = scalar_lea.vmem [#allocation5], %s197
          %199 = dma.done %s195, 128
        $region44: #{tpu_custom_call.1} parent=39 // pred_fallthru
          _
      $region40: #{tpu_custom_call.1} parent=5 // pred_fallthru
        _
    $region6: #{tpu_custom_call.1} parent=1 // loop_footer
      %s17 = sadd.s32 1, %s13
    $region7: #{tpu_custom_call.1} parent=1 // loop_footer_branch
      %12 = sbr.rel target = $region3
    $region8: #{tpu_custom_call.1} parent=1 // loop_exit
      _
    %200 = vsyncpa [#allocation3], 1
    %s201 = scalar_lea.sflag [#allocation3], 1
    %202 = vsyncpa %s201, 1
    %203 = vsyncpa [#allocation4], 1
    %s204 = scalar_lea.sflag [#allocation4], 1
    %205 = vsyncpa %s204, 1

</llo_original>
